<compile_context>
chip_gen: v6e
topology: v6e:2x2x1
jax: 0.10.0
libtpu: 0.0.40
codegen_flags: <defaults>
</compile_context>

<pallas_src>
import jax
import jax.numpy as jnp
from jax.experimental import pallas as pl
from jax.experimental.pallas import tpu as pltpu

_LANE = 128
_SUBLANE = 8
_MAX_BATCH_TILE = 8192

# Probed lazily: does this JAX/Mosaic accept pipeline_mode=pl.Buffered(1)?
_PARAM_SINGLE_BUFFER_OK = None


def _round_up(n, m):
    return ((n + m - 1) // m) * m


def _vmem_tile_bytes(rows, cols, itemsize=4):
    """Layout-aware VMEM footprint of a (rows, cols) tile."""
    return _round_up(max(int(rows), 1), _SUBLANE) * _round_up(
        max(int(cols), 1), _LANE) * int(itemsize)


def _vmem_capacity_bytes():
    """Per-core VMEM capacity; conservative fallback if the query fails."""
    try:
        info = pltpu.get_tpu_info()
        cap = getattr(info, "vmem_capacity_bytes", None)
        if cap:
            return int(cap)
    except Exception:
        pass
    return 64 << 20  # v7x per-TensorCore VMEM; safe lower bound everywhere


def _make_mlp_kernel(n_layers, matmul_dtype):
    """Kernel body for an MLP with n_layers Linear layers.

    Ref order: x_ref, (w0, b0, w1, b1, ..., w_{L-1}, b_{L-1}), o_ref
    Tanh after every layer except the last one (matching Critic).
    """

    def kernel(*refs):
        x_ref = refs[0]
        o_ref = refs[-1]
        param_refs = refs[1:-1]

        h = x_ref[...]
        if h.dtype != matmul_dtype:
            h = h.astype(matmul_dtype)
        for i in range(n_layers):
            w = param_refs[2 * i][...]
            if w.dtype != matmul_dtype:
                w = w.astype(matmul_dtype)
            b = param_refs[2 * i + 1][...]            # (1, d_out) f32
            h = jnp.dot(h, w, preferred_element_type=jnp.float32) + b
            if i < n_layers - 1:
                h = jnp.tanh(h)                        # f32 tanh on EUP
                if matmul_dtype != jnp.float32:
                    h = h.astype(matmul_dtype)
        o_ref[...] = h.astype(o_ref.dtype)

    return kernel


def prepare_critic_params(weights, biases, *, param_dtype=jnp.float32):
    """Pad hidden widths to 128 lanes ONCE (call at init, not per forward).

    The output head keeps its true width (no lane padding) so the kernel's
    output writeback is (B, out_dim).  Zero padding keeps the math exact:
    padded weight cols & biases are 0 (padded activations are tanh(0)=0) and
    padded weight rows are 0 (padded activations never contribute downstream).
    Returns (params_tuple, pdims) with params = (w0, b0, w1, b1, ...).
    """
    n_layers = len(weights)
    assert len(biases) == n_layers and n_layers >= 1
    dims = [int(weights[0].shape[0])] + [int(w.shape[1]) for w in weights]
    # Pad hidden widths only; keep input dim and output head un-padded.
    pdims = [dims[0]] + [_round_up(d, _LANE) for d in dims[1:-1]] + [dims[-1]]

    params = []
    for i, (w, b) in enumerate(zip(weights, biases)):
        d_in_p, d_out_p = pdims[i], pdims[i + 1]
        w = jnp.asarray(w, jnp.float32)
        b = jnp.asarray(b, jnp.float32)
        if (d_in_p, d_out_p) != tuple(w.shape):
            w_p = jnp.zeros((d_in_p, d_out_p), jnp.float32)
            w_p = w_p.at[: w.shape[0], : w.shape[1]].set(w)
        else:
            w_p = w
        b_p = jnp.zeros((1, d_out_p), jnp.float32)
        b_p = b_p.at[0, : b.shape[0]].set(b)
        params.append(w_p.astype(param_dtype))   # optionally bf16 (halves DMA)
        params.append(b_p)                        # bias stays f32
    return tuple(params), tuple(pdims)


def _vmem_estimate(t, in_dim, out_dim, pdims, params, param_buffers=2):
    """Layout-aware VMEM estimate for a batch tile of t rows."""
    widest = max(pdims[1:])
    xio = 2 * _vmem_tile_bytes(t, in_dim) + 2 * _vmem_tile_bytes(t, out_dim)
    acts = 4 * _vmem_tile_bytes(t, widest)        # live f32 activation temps
    pbytes = param_buffers * sum(
        _vmem_tile_bytes(p.shape[0], p.shape[1], jnp.dtype(p.dtype).itemsize)
        for p in params)
    return xio + acts + pbytes


def _param_specs(params, single_buffer):
    if single_buffer:
        return [
            pl.BlockSpec(p.shape, lambda i: (0, 0),
                         pipeline_mode=pl.Buffered(1))
            for p in params
        ]
    return [pl.BlockSpec(p.shape, lambda i: (0, 0)) for p in params]


def critic_forward_pallas(x, prepared, *, batch_tile=None,
                          matmul_dtype=jnp.float32, vmem_limit_bytes=None):
    """Fused Critic MLP forward pass as a single Pallas kernel.

    x:         (B, input_dim) float32
    prepared:  output of prepare_critic_params(weights, biases)
    returns:   (B, output_dim) float32
    """
    global _PARAM_SINGLE_BUFFER_OK

    params, pdims = prepared
    n_layers = len(params) // 2
    in_dim, out_dim = pdims[0], pdims[-1]

    B = int(x.shape[0])
    assert int(x.shape[1]) == in_dim, (x.shape, in_dim)

    # ---- generation-aware VMEM budget --------------------------------------
    vmem_cap = _vmem_capacity_bytes()
    tile_budget = min(vmem_cap // 2, 64 << 20)   # ~32 MiB v7x, ~64 MiB v5e/v6e

    def est(t):
        return _vmem_estimate(t, in_dim, out_dim, pdims, params,
                              param_buffers=2)

    # ---- pick a batch tile: big (amortize ~0.35us/step), multiple of 8,
    #      fits the budget, and leaves >=2 grid steps for v7x megacore --------
    if batch_tile is None:
        batch_tile = min(_MAX_BATCH_TILE, _round_up(B, _SUBLANE))
        while batch_tile > _SUBLANE and est(batch_tile) > tile_budget:
            batch_tile = _round_up(batch_tile // 2, _SUBLANE)
        if B >= 2 * _SUBLANE:
            batch_tile = min(batch_tile,
                             _round_up(pl.cdiv(B, 2), _SUBLANE))
    batch_tile = max(_SUBLANE, _round_up(int(batch_tile), _SUBLANE))

    grid = (pl.cdiv(B, batch_tile),)   # partial tail block handled by Pallas

    if vmem_limit_bytes is None:
        vmem_limit_bytes = int(min(max(est(batch_tile) + (4 << 20), 16 << 20),
                                   (vmem_cap * 3) // 4))

    # BlockSpecs: batch-tiled x / out; whole-array params resident in VMEM.
    x_spec = pl.BlockSpec((batch_tile, in_dim), lambda i: (i, 0))
    out_spec = pl.BlockSpec((batch_tile, out_dim), lambda i: (i, 0))

    kernel = _make_mlp_kernel(n_layers, matmul_dtype)

    def run(single_buffer):
        return pl.pallas_call(
            kernel,
            out_shape=jax.ShapeDtypeStruct((B, out_dim), jnp.float32),
            grid_spec=pltpu.PrefetchScalarGridSpec(
                num_scalar_prefetch=0,
                grid=grid,
                in_specs=[x_spec] + _param_specs(params, single_buffer),
                out_specs=out_spec,
            ),
            compiler_params=pltpu.CompilerParams(
                dimension_semantics=("parallel",),
                vmem_limit_bytes=vmem_limit_bytes,
            ),
        )(x, *params)

    if _PARAM_SINGLE_BUFFER_OK is None:
        try:
            out = jax.block_until_ready(run(True))
            _PARAM_SINGLE_BUFFER_OK = True
            return out
        except Exception:
            _PARAM_SINGLE_BUFFER_OK = False
            return run(False)
    return run(_PARAM_SINGLE_BUFFER_OK)


def critic_forward_ref(x, weights, biases):
    """Pure-JAX reference (mirrors the PyTorch Critic.forward)."""
    h = x
    for i, (w, b) in enumerate(zip(weights, biases)):
        h = h @ w + b
        if i < len(weights) - 1:
            h = jnp.tanh(h)
    return h


def init_critic_params(key, input_dim, hidden_dims, output_dim):
    """Deterministic synthetic parameters with the same shapes as Critic.__init__."""
    dims = [input_dim] + list(hidden_dims) + [output_dim]
    weights, biases = [], []
    for d_in, d_out in zip(dims[:-1], dims[1:]):
        key, wk, bk = jax.random.split(key, 3)
        bound = 1.0 / jnp.sqrt(d_in)   # torch.nn.Linear-like default init range
        weights.append(
            jax.random.uniform(wk, (d_in, d_out), jnp.float32, -bound, bound))
        biases.append(
            jax.random.uniform(bk, (d_out,), jnp.float32, -bound, bound))
    return weights, biases


if __name__ == "__main__":
    # Small shapes consistent with the module: flat observation -> scalar value.
    batch = 8
    input_dim = 32
    hidden_dims = [64, 64]
    output_dim = 1

    key = jax.random.PRNGKey(0)
    key, xk = jax.random.split(key)
    x = jax.random.normal(xk, (batch, input_dim), jnp.float32)

    weights, biases = init_critic_params(key, input_dim, hidden_dims, output_dim)
    prepared = prepare_critic_params(weights, biases)   # pad once, reuse

    # Check 1: tiny batch (single grid step).
    out = jax.block_until_ready(critic_forward_pallas(x, prepared))
    ref = critic_forward_ref(x, weights, biases)
    assert out.shape == (batch, output_dim), out.shape
    assert jnp.allclose(out, ref, atol=1e-5, rtol=1e-5), (
        f"max abs err {jnp.max(jnp.abs(out - ref))}")

    # Check 2: non-multiple batch + explicit tile -> multi-step pipelined grid
    # with a partial tail block (exercises Pallas edge-block semantics).
    batch2 = 300
    key, xk2 = jax.random.split(key)
    x2 = jax.random.normal(xk2, (batch2, input_dim), jnp.float32)
    out2 = jax.block_until_ready(
        critic_forward_pallas(x2, prepared, batch_tile=64))
    ref2 = critic_forward_ref(x2, weights, biases)
    assert out2.shape == (batch2, output_dim), out2.shape
    assert jnp.allclose(out2, ref2, atol=1e-5, rtol=1e-5), (
        f"max abs err {jnp.max(jnp.abs(out2 - ref2))}")

    # Check 3: auto tile selection (>=2 grid steps, budget-derived tile).
    out3 = jax.block_until_ready(critic_forward_pallas(x2, prepared))
    assert out3.shape == (batch2, output_dim), out3.shape
    assert jnp.allclose(out3, ref2, atol=1e-5, rtol=1e-5), (
        f"max abs err {jnp.max(jnp.abs(out3 - ref2))}")

    print("KERNEL_OK")
</pallas_src>

<mosaic_0001>
module attributes {stable_mosaic.version = 11 : i64} {
  func.func @kernel(%arg0: i32, %arg1: memref<8x32xf32, #tpu.memory_space<vmem>>, %arg2: memref<32x128xf32, #tpu.memory_space<vmem>>, %arg3: memref<1x128xf32, #tpu.memory_space<vmem>>, %arg4: memref<128x128xf32, #tpu.memory_space<vmem>>, %arg5: memref<1x128xf32, #tpu.memory_space<vmem>>, %arg6: memref<128x1xf32, #tpu.memory_space<vmem>>, %arg7: memref<1x1xf32, #tpu.memory_space<vmem>>, %arg8: memref<8x1xf32, #tpu.memory_space<vmem>>) attributes {dimension_semantics = [#tpu.dimension_semantics<parallel>], iteration_bounds = array<i64: 1>, scalar_prefetch = 0 : i64, scratch_operands = 0 : i64, tpu.core_type = #tpu.core_type<tc>, window_params = [{transform_indices = @transform_0, window_bounds = array<i64: 8, 32>}, {pipeline_mode = #tpu.pipeline_mode<synchronous>, transform_indices = @transform_1, window_bounds = array<i64: 32, 128>}, {pipeline_mode = #tpu.pipeline_mode<synchronous>, transform_indices = @transform_2, window_bounds = array<i64: 1, 128>}, {pipeline_mode = #tpu.pipeline_mode<synchronous>, transform_indices = @transform_3, window_bounds = array<i64: 128, 128>}, {pipeline_mode = #tpu.pipeline_mode<synchronous>, transform_indices = @transform_4, window_bounds = array<i64: 1, 128>}, {pipeline_mode = #tpu.pipeline_mode<synchronous>, transform_indices = @transform_5, window_bounds = array<i64: 128, 1>}, {pipeline_mode = #tpu.pipeline_mode<synchronous>, transform_indices = @transform_6, window_bounds = array<i64: 1, 1>}, {transform_indices = @transform_7, window_bounds = array<i64: 8, 1>}]} {
    %c0 = arith.constant 0 : index
    %c0_0 = arith.constant 0 : index
    %0 = vector.load %arg1[%c0, %c0_0] : memref<8x32xf32, #tpu.memory_space<vmem>>, vector<8x32xf32>
    %c0_1 = arith.constant 0 : index
    %c0_2 = arith.constant 0 : index
    %1 = vector.load %arg2[%c0_1, %c0_2] : memref<32x128xf32, #tpu.memory_space<vmem>>, vector<32x128xf32>
    %c0_3 = arith.constant 0 : index
    %c0_4 = arith.constant 0 : index
    %2 = vector.load %arg3[%c0_3, %c0_4] : memref<1x128xf32, #tpu.memory_space<vmem>>, vector<1x128xf32>
    %cst = arith.constant dense<0.000000e+00> : vector<8x128xf32>
    %3 = tpu.matmul %0, %1, %cst {dimension_numbers = #tpu.dot_dimension_numbers<[1], [0], [0], [1], [0, 0, 1, 1], [], []>} : vector<8x32xf32>, vector<32x128xf32>, vector<8x128xf32> -> vector<8x128xf32>
    %4 = vector.broadcast %2 : vector<1x128xf32> to vector<8x128xf32>
    %5 = arith.addf %3, %4 : vector<8x128xf32>
    %6 = math.tanh %5 : vector<8x128xf32>
    %c0_5 = arith.constant 0 : index
    %c0_6 = arith.constant 0 : index
    %7 = vector.load %arg4[%c0_5, %c0_6] : memref<128x128xf32, #tpu.memory_space<vmem>>, vector<128x128xf32>
    %c0_7 = arith.constant 0 : index
    %c0_8 = arith.constant 0 : index
    %8 = vector.load %arg5[%c0_7, %c0_8] : memref<1x128xf32, #tpu.memory_space<vmem>>, vector<1x128xf32>
    %cst_9 = arith.constant dense<0.000000e+00> : vector<8x128xf32>
    %9 = tpu.matmul %6, %7, %cst_9 {dimension_numbers = #tpu.dot_dimension_numbers<[1], [0], [0], [1], [0, 0, 1, 1], [], []>} : vector<8x128xf32>, vector<128x128xf32>, vector<8x128xf32> -> vector<8x128xf32>
    %10 = vector.broadcast %8 : vector<1x128xf32> to vector<8x128xf32>
    %11 = arith.addf %9, %10 : vector<8x128xf32>
    %12 = math.tanh %11 : vector<8x128xf32>
    %c0_10 = arith.constant 0 : index
    %c0_11 = arith.constant 0 : index
    %13 = vector.load %arg6[%c0_10, %c0_11] : memref<128x1xf32, #tpu.memory_space<vmem>>, vector<128x1xf32>
    %c0_12 = arith.constant 0 : index
    %c0_13 = arith.constant 0 : index
    %14 = vector.load %arg7[%c0_12, %c0_13] : memref<1x1xf32, #tpu.memory_space<vmem>>, vector<1x1xf32>
    %cst_14 = arith.constant dense<0.000000e+00> : vector<8x1xf32>
    %15 = tpu.matmul %12, %13, %cst_14 {dimension_numbers = #tpu.dot_dimension_numbers<[1], [0], [0], [1], [0, 0, 1, 1], [], []>} : vector<8x128xf32>, vector<128x1xf32>, vector<8x1xf32> -> vector<8x1xf32>
    %16 = vector.broadcast %14 : vector<1x1xf32> to vector<8x1xf32>
    %17 = arith.addf %15, %16 : vector<8x1xf32>
    %c0_15 = arith.constant 0 : index
    %c0_16 = arith.constant 0 : index
    %18 = vector.load %arg8[%c0_15, %c0_16] : memref<8x1xf32, #tpu.memory_space<vmem>>, vector<8x1xf32>
    tpu.vector_store %arg8[%c0_15, %c0_16], %17 {strides = array<i32>} : memref<8x1xf32, #tpu.memory_space<vmem>>, vector<8x1xf32>,
    return
  }
  func.func @transform_0(%arg0: i32) -> (i32, i32) {
    %c0_i32 = arith.constant 0 : i32
    %c0_i32_0 = arith.constant 0 : i32
    return %arg0, %c0_i32 : i32, i32
  }
  func.func @transform_1(%arg0: i32) -> (i32, i32) {
    %c0_i32 = arith.constant 0 : i32
    %c0_i32_0 = arith.constant 0 : i32
    %c0_i32_1 = arith.constant 0 : i32
    return %c0_i32, %c0_i32_0 : i32, i32
  }
  func.func @transform_2(%arg0: i32) -> (i32, i32) {
    %c0_i32 = arith.constant 0 : i32
    %c0_i32_0 = arith.constant 0 : i32
    %c0_i32_1 = arith.constant 0 : i32
    return %c0_i32, %c0_i32_0 : i32, i32
  }
  func.func @transform_3(%arg0: i32) -> (i32, i32) {
    %c0_i32 = arith.constant 0 : i32
    %c0_i32_0 = arith.constant 0 : i32
    %c0_i32_1 = arith.constant 0 : i32
    return %c0_i32, %c0_i32_0 : i32, i32
  }
  func.func @transform_4(%arg0: i32) -> (i32, i32) {
    %c0_i32 = arith.constant 0 : i32
    %c0_i32_0 = arith.constant 0 : i32
    %c0_i32_1 = arith.constant 0 : i32
    return %c0_i32, %c0_i32_0 : i32, i32
  }
  func.func @transform_5(%arg0: i32) -> (i32, i32) {
    %c0_i32 = arith.constant 0 : i32
    %c0_i32_0 = arith.constant 0 : i32
    %c0_i32_1 = arith.constant 0 : i32
    return %c0_i32, %c0_i32_0 : i32, i32
  }
  func.func @transform_6(%arg0: i32) -> (i32, i32) {
    %c0_i32 = arith.constant 0 : i32
    %c0_i32_0 = arith.constant 0 : i32
    %c0_i32_1 = arith.constant 0 : i32
    return %c0_i32, %c0_i32_0 : i32, i32
  }
  func.func @transform_7(%arg0: i32) -> (i32, i32) {
    %c0_i32 = arith.constant 0 : i32
    %c0_i32_0 = arith.constant 0 : i32
    return %arg0, %c0_i32 : i32, i32
  }
}

module attributes {stable_mosaic.version = 11 : i64} {
  func.func @kernel(%arg0: i32, %arg1: memref<8x32xf32, #tpu.memory_space<vmem>>, %arg2: memref<32x128xf32, #tpu.memory_space<vmem>>, %arg3: memref<1x128xf32, #tpu.memory_space<vmem>>, %arg4: memref<128x128xf32, #tpu.memory_space<vmem>>, %arg5: memref<1x128xf32, #tpu.memory_space<vmem>>, %arg6: memref<128x1xf32, #tpu.memory_space<vmem>>, %arg7: memref<1x1xf32, #tpu.memory_space<vmem>>, %arg8: memref<8x1xf32, #tpu.memory_space<vmem>>) attributes {dimension_semantics = [#tpu.dimension_semantics<parallel>], iteration_bounds = array<i64: 1>, scalar_prefetch = 0 : i64, scratch_operands = 0 : i64, tpu.core_type = #tpu.core_type<tc>, window_params = [{transform_indices = @transform_0, window_bounds = array<i64: 8, 32>}, {pipeline_mode = #tpu.pipeline_mode<synchronous>, transform_indices = @transform_1, window_bounds = array<i64: 32, 128>}, {pipeline_mode = #tpu.pipeline_mode<synchronous>, transform_indices = @transform_2, window_bounds = array<i64: 1, 128>}, {pipeline_mode = #tpu.pipeline_mode<synchronous>, transform_indices = @transform_3, window_bounds = array<i64: 128, 128>}, {pipeline_mode = #tpu.pipeline_mode<synchronous>, transform_indices = @transform_4, window_bounds = array<i64: 1, 128>}, {pipeline_mode = #tpu.pipeline_mode<synchronous>, transform_indices = @transform_5, window_bounds = array<i64: 128, 1>}, {pipeline_mode = #tpu.pipeline_mode<synchronous>, transform_indices = @transform_6, window_bounds = array<i64: 1, 1>}, {transform_indices = @transform_7, window_bounds = array<i64: 8, 1>}]} {
    %c0 = arith.constant 0 : index
    %c0_0 = arith.constant 0 : index
    %0 = vector.load %arg1[%c0, %c0_0] : memref<8x32xf32, #tpu.memory_space<vmem>>, vector<8x32xf32>
    %c0_1 = arith.constant 0 : index
    %c0_2 = arith.constant 0 : index
    %1 = vector.load %arg2[%c0_1, %c0_2] : memref<32x128xf32, #tpu.memory_space<vmem>>, vector<32x128xf32>
    %c0_3 = arith.constant 0 : index
    %c0_4 = arith.constant 0 : index
    %2 = vector.load %arg3[%c0_3, %c0_4] : memref<1x128xf32, #tpu.memory_space<vmem>>, vector<1x128xf32>
    %cst = arith.constant dense<0.000000e+00> : vector<8x128xf32>
    %3 = tpu.matmul %0, %1, %cst {dimension_numbers = #tpu.dot_dimension_numbers<[1], [0], [0], [1], [0, 0, 1, 1], [], []>} : vector<8x32xf32>, vector<32x128xf32>, vector<8x128xf32> -> vector<8x128xf32>
    %4 = vector.broadcast %2 : vector<1x128xf32> to vector<8x128xf32>
    %5 = arith.addf %3, %4 : vector<8x128xf32>
    %6 = math.tanh %5 : vector<8x128xf32>
    %c0_5 = arith.constant 0 : index
    %c0_6 = arith.constant 0 : index
    %7 = vector.load %arg4[%c0_5, %c0_6] : memref<128x128xf32, #tpu.memory_space<vmem>>, vector<128x128xf32>
    %c0_7 = arith.constant 0 : index
    %c0_8 = arith.constant 0 : index
    %8 = vector.load %arg5[%c0_7, %c0_8] : memref<1x128xf32, #tpu.memory_space<vmem>>, vector<1x128xf32>
    %cst_9 = arith.constant dense<0.000000e+00> : vector<8x128xf32>
    %9 = tpu.matmul %6, %7, %cst_9 {dimension_numbers = #tpu.dot_dimension_numbers<[1], [0], [0], [1], [0, 0, 1, 1], [], []>} : vector<8x128xf32>, vector<128x128xf32>, vector<8x128xf32> -> vector<8x128xf32>
    %10 = vector.broadcast %8 : vector<1x128xf32> to vector<8x128xf32>
    %11 = arith.addf %9, %10 : vector<8x128xf32>
    %12 = math.tanh %11 : vector<8x128xf32>
    %c0_10 = arith.constant 0 : index
    %c0_11 = arith.constant 0 : index
    %13 = vector.load %arg6[%c0_10, %c0_11] : memref<128x1xf32, #tpu.memory_space<vmem>>, vector<128x1xf32>
    %c0_12 = arith.constant 0 : index
    %c0_13 = arith.constant 0 : index
    %14 = vector.load %arg7[%c0_12, %c0_13] : memref<1x1xf32, #tpu.memory_space<vmem>>, vector<1x1xf32>
    %cst_14 = arith.constant dense<0.000000e+00> : vector<8x1xf32>
    %15 = tpu.matmul %12, %13, %cst_14 {dimension_numbers = #tpu.dot_dimension_numbers<[1], [0], [0], [1], [0, 0, 1, 1], [], []>} : vector<8x128xf32>, vector<128x1xf32>, vector<8x1xf32> -> vector<8x1xf32>
    %16 = vector.broadcast %14 : vector<1x1xf32> to vector<8x1xf32>
    %17 = arith.addf %15, %16 : vector<8x1xf32>
    %c0_15 = arith.constant 0 : index
    %c0_16 = arith.constant 0 : index
    %18 = vector.load %arg8[%c0_15, %c0_16] : memref<8x1xf32, #tpu.memory_space<vmem>>, vector<8x1xf32>
    tpu.vector_store %arg8[%c0_15, %c0_16], %17 {strides = array<i32>} : memref<8x1xf32, #tpu.memory_space<vmem>>, vector<8x1xf32>,
    return
  }
  func.func @transform_0(%arg0: i32) -> (i32, i32) {
    %c0_i32 = arith.constant 0 : i32
    %c0_i32_0 = arith.constant 0 : i32
    return %arg0, %c0_i32 : i32, i32
  }
  func.func @transform_1(%arg0: i32) -> (i32, i32) {
    %c0_i32 = arith.constant 0 : i32
    %c0_i32_0 = arith.constant 0 : i32
    %c0_i32_1 = arith.constant 0 : i32
    return %c0_i32, %c0_i32_0 : i32, i32
  }
  func.func @transform_2(%arg0: i32) -> (i32, i32) {
    %c0_i32 = arith.constant 0 : i32
    %c0_i32_0 = arith.constant 0 : i32
    %c0_i32_1 = arith.constant 0 : i32
    return %c0_i32, %c0_i32_0 : i32, i32
  }
  func.func @transform_3(%arg0: i32) -> (i32, i32) {
    %c0_i32 = arith.constant 0 : i32
    %c0_i32_0 = arith.constant 0 : i32
    %c0_i32_1 = arith.constant 0 : i32
    return %c0_i32, %c0_i32_0 : i32, i32
  }
  func.func @transform_4(%arg0: i32) -> (i32, i32) {
    %c0_i32 = arith.constant 0 : i32
    %c0_i32_0 = arith.constant 0 : i32
    %c0_i32_1 = arith.constant 0 : i32
    return %c0_i32, %c0_i32_0 : i32, i32
  }
  func.func @transform_5(%arg0: i32) -> (i32, i32) {
    %c0_i32 = arith.constant 0 : i32
    %c0_i32_0 = arith.constant 0 : i32
    %c0_i32_1 = arith.constant 0 : i32
    return %c0_i32, %c0_i32_0 : i32, i32
  }
  func.func @transform_6(%arg0: i32) -> (i32, i32) {
    %c0_i32 = arith.constant 0 : i32
    %c0_i32_0 = arith.constant 0 : i32
    %c0_i32_1 = arith.constant 0 : i32
    return %c0_i32, %c0_i32_0 : i32, i32
  }
  func.func @transform_7(%arg0: i32) -> (i32, i32) {
    %c0_i32 = arith.constant 0 : i32
    %c0_i32_0 = arith.constant 0 : i32
    return %arg0, %c0_i32 : i32, i32
  }
}

</mosaic_0001>

<llo_original>
// kernel: tpu_custom_call.1
$region0: #{tpu_custom_call.1}
  #allocation0 [shape = 'u32[]', space=smem, size = 0x4, offset = 0x4, fixed_abs, tag = 'smem constant byte address 0x4 - core index']
  #allocation1 [shape = 'u32[144,128]{1,0:T(1,128)}', space=vmem, size = 0x12000, scoped, tag = 'internal scratch']
  #allocation2 [shape = 'f32[1,1]{1,0:T(1,128)S(1)}', space=vmem, size = 0x200, scoped, tag = 'scoped memory for tpu_custom_call.1']
  %s0 = inlined_call_operand.vmem [shape: f32[8,32], index: 0, kind: input, shape index: {}]
  %s1 = inlined_call_operand.hbm [shape: f32[32,128], index: 1, kind: input, shape index: {}]
  %s2 = inlined_call_operand.hbm [shape: f32[1,128], index: 2, kind: input, shape index: {}]
  %s3 = inlined_call_operand.vmem [shape: f32[128,128], index: 3, kind: input, shape index: {}]
  %s4 = inlined_call_operand.vmem [shape: f32[1,128], index: 4, kind: input, shape index: {}]
  %s5 = inlined_call_operand.vmem [shape: f32[128,1], index: 5, kind: input, shape index: {}]
  %s6 = inlined_call_operand.<no memory space> [shape: f32[1,1], index: 6, kind: input, shape index: {}]
  %s7 = inlined_call_operand.vmem [shape: f32[8,1], index: 7, kind: output, shape index: {}]
  %s8 = sld [smem:[#allocation0]]
  $region46: #{tpu_custom_call.1} parent=0
    _
  %s10 = ssub.s32 1, %s8
  %s11 = scalar_select 0, %s10, %s8
  %v12 = vstv %s6
  %13 = vst [vmem:[#allocation2] sm:$0x1] %v12
  $region1: #{tpu_custom_call.1} parent=0
    #allocation3 [shape = 'u8[16384]{0}', space=vmem, size = 0x4000, scoped, tag = 'input window, operand 1, single buffered']
    #allocation4 [shape = 's32[1]{0}', space=sflag, size = 0x4, scoped, tag = 'scoped memory for tpu_custom_call.1']
    #allocation5 [shape = 'u8[512]{0}', space=vmem, size = 0x400, scoped, tag = 'input window, operand 2, single buffered']
    #allocation6 [shape = 's32[1]{0}', space=sflag, size = 0x4, scoped, tag = 'scoped memory for tpu_custom_call.1']
    %14 = vsyncpa [#allocation4], 0
    %15 = vsyncpa [#allocation6], 0
    // Predicated region
    $region2: #{tpu_custom_call.1} parent=1 // pred_check
      _
    $region3: #{tpu_custom_call.1} parent=1 // pred_check_branch
      %17 = sbr.rel (0) target = $region5
    $region4: #{tpu_custom_call.1} parent=1 // pred_region
      _
    $region5: #{tpu_custom_call.1} parent=1 // pred_fallthru
      _
    // Predicated region
    $region6: #{tpu_custom_call.1} parent=1 // pred_check
      _
    $region7: #{tpu_custom_call.1} parent=1 // pred_check_branch
      %19 = sbr.rel (0) target = $region9
    $region8: #{tpu_custom_call.1} parent=1 // pred_region
      %s21 = ssub.s32 512, 512
      %22 = vsyncadd [#allocation4], %s21
      %s23 = sshll.u32 [#allocation3], 4
      %s24 = int_to_ptr.vmem [resolvable:$true] %s23
      %29 = dma.hbm_to_vmem [thread:$0]  %s1, 512, %s24, [#allocation4], 128, 128, 8
    $region9: #{tpu_custom_call.1} parent=1 // pred_fallthru
      _
    // Predicated region
    $region10: #{tpu_custom_call.1} parent=1 // pred_check
      _
    $region11: #{tpu_custom_call.1} parent=1 // pred_check_branch
      %31 = sbr.rel (0) target = $region13
    $region12: #{tpu_custom_call.1} parent=1 // pred_region
      %s33 = ssub.s32 16, 16
      %34 = vsyncadd [#allocation6], %s33
      %s36 = sshll.u32 [#allocation5], 4
      %s37 = int_to_ptr.vmem [resolvable:$true] %s36
      %39 = dma.hbm_to_vmem [thread:$0]  %s2, 16, %s37, [#allocation6]
    $region13: #{tpu_custom_call.1} parent=1 // pred_fallthru
      _
    // Predicated region
    $region14: #{tpu_custom_call.1} parent=1 // pred_check
      _
    $region15: #{tpu_custom_call.1} parent=1 // pred_check_branch
      %41 = sbr.rel (0) target = $region17
    $region16: #{tpu_custom_call.1} parent=1 // pred_region
      _
    $region17: #{tpu_custom_call.1} parent=1 // pred_fallthru
      _
    // Predicated region
    $region18: #{tpu_custom_call.1} parent=1 // pred_check
      _
    $region19: #{tpu_custom_call.1} parent=1 // pred_check_branch
      %43 = sbr.rel (0) target = $region21
    $region20: #{tpu_custom_call.1} parent=1 // pred_region
      _
    $region21: #{tpu_custom_call.1} parent=1 // pred_fallthru
      _
    // Predicated region
    $region22: #{tpu_custom_call.1} parent=1 // pred_check
      _
    $region23: #{tpu_custom_call.1} parent=1 // pred_check_branch
      %45 = sbr.rel (0) target = $region25
    $region24: #{tpu_custom_call.1} parent=1 // pred_region
      _
    $region25: #{tpu_custom_call.1} parent=1 // pred_fallthru
      _
    // Predicated region
    $region26: #{tpu_custom_call.1} parent=1 // pred_check
      _
    $region27: #{tpu_custom_call.1} parent=1 // pred_check_branch
      %47 = sbr.rel (0) target = $region29
    $region28: #{tpu_custom_call.1} parent=1 // pred_region
      _
    $region29: #{tpu_custom_call.1} parent=1 // pred_fallthru
      _
    // Predicated region
    $region30: #{tpu_custom_call.1} parent=1 // pred_check
      _
    $region31: #{tpu_custom_call.1} parent=1 // pred_check_branch
      %49 = sbr.rel (0) target = $region33
    $region32: #{tpu_custom_call.1} parent=1 // pred_region
      %50 = dma.done [#allocation4], 512
    $region33: #{tpu_custom_call.1} parent=1 // pred_fallthru
      _
    // Predicated region
    $region34: #{tpu_custom_call.1} parent=1 // pred_check
      _
    $region35: #{tpu_custom_call.1} parent=1 // pred_check_branch
      %52 = sbr.rel (0) target = $region37
    $region36: #{tpu_custom_call.1} parent=1 // pred_region
      %53 = dma.done [#allocation6], 16
    $region37: #{tpu_custom_call.1} parent=1 // pred_fallthru
      _
    %v54 = vld [vmem:[%s0] sm:$0xff]
    %v55 = vld [vmem:[#allocation3] sm:$0xff]
    %v56 = vld [vmem:[#allocation3 + $0x8] sm:$0xff]
    %v57 = vld [vmem:[#allocation3 + $0x10] sm:$0xff]
    %v58 = vld [vmem:[#allocation3 + $0x18] sm:$0xff]
    %v59 = vld [vmem:[#allocation5] sm:$0x1]
    %v61 = vlaneseq
    %v62 = vshrl.u32 %v61, 7
    %v63 = vsub.s32 0, %v62
    %v64 = vrot.slane %v59, %v63
    %vm66 = vcmask 261120
    %v68 = vsel %vm66, %v54, 0
    %70 = vmatprep.subr.mxu0 0.0
    %71 = vmatpush1.msra.mxu0 0.0
    %72 = vmatprep.subr.mxu0 0.0
    %73 = vmatpush1.msra.mxu0 0.0
    %74 = vmatprep.subr.mxu0 0.0
    %75 = vmatpush1.msra.mxu0 0.0
    %76 = vmatprep.subr.mxu0 0.0
    %77 = vmatpush1.msra.mxu0 0.0
    %78 = vmatprep.subr.mxu0 0.0
    %79 = vmatpush1.msra.mxu0 0.0
    %80 = vmatprep.subr.mxu0 0.0
    %81 = vmatpush1.msra.mxu0 0.0
    %82 = vmatprep.subr.mxu0 0.0
    %83 = vmatpush1.msra.mxu0 0.0
    %84 = vmatprep.subr.mxu0 0.0
    %85 = vmatpush1.msra.mxu0 0.0
    %86 = vmatprep.subr.mxu0 0.0
    %87 = vmatpush1.msra.mxu0 0.0
    %88 = vmatprep.subr.mxu0 0.0
    %89 = vmatpush1.msra.mxu0 0.0
    %90 = vmatprep.subr.mxu0 0.0
    %91 = vmatpush1.msra.mxu0 0.0
    %92 = vmatprep.subr.mxu0 0.0
    %93 = vmatpush1.msra.mxu0 0.0
    %94 = vmatprep.subr.mxu0 0.0
    %95 = vmatpush1.msra.mxu0 %v58
    %96 = vmatprep.subr.mxu0 0.0
    %97 = vmatpush1.msra.mxu0 %v57
    %98 = vmatprep.subr.mxu0 0.0
    %99 = vmatpush1.msra.mxu0 %v56
    %100 = vmatprep.subr.mxu0 0.0
    %101 = vmatpush1.msra.mxu0 %v55
    %102 = vmatprep.subr.mxu0 0.0
    %103 = vmatpush2.msra.mxu0 0.0
    %104 = vmatprep.subr.mxu0 0.0
    %105 = vmatpush2.msra.mxu0 0.0
    %106 = vmatprep.subr.mxu0 0.0
    %107 = vmatpush2.msra.mxu0 0.0
    %108 = vmatprep.subr.mxu0 0.0
    %109 = vmatpush2.msra.mxu0 0.0
    %110 = vmatprep.subr.mxu0 0.0
    %111 = vmatpush2.msra.mxu0 0.0
    %112 = vmatprep.subr.mxu0 0.0
    %113 = vmatpush2.msra.mxu0 0.0
    %114 = vmatprep.subr.mxu0 0.0
    %115 = vmatpush2.msra.mxu0 0.0
    %116 = vmatprep.subr.mxu0 0.0
    %117 = vmatpush2.msra.mxu0 0.0
    %118 = vmatprep.subr.mxu0 0.0
    %119 = vmatpush2.msra.mxu0 0.0
    %120 = vmatprep.subr.mxu0 0.0
    %121 = vmatpush2.msra.mxu0 0.0
    %122 = vmatprep.subr.mxu0 0.0
    %123 = vmatpush2.msra.mxu0 0.0
    %124 = vmatprep.subr.mxu0 0.0
    %125 = vmatpush2.msra.mxu0 0.0
    %126 = vmatprep.subr.mxu0 0.0
    %127 = vmatpush2.msra.mxu0 0.0
    %128 = vmatprep.subr.mxu0 0.0
    %129 = vmatpush2.msra.mxu0 0.0
    %130 = vmatprep.subr.mxu0 0.0
    %131 = vmatpush2.msra.mxu0 0.0
    %132 = vmatprep.subr.mxu0 0.0
    %133 = vmatpush2.msra.mxu0 0.0
    %134 = vmatprep.mubr.f32.mxu0 0.0
    %135 = vmatmul.mubr.f32.gmra.mxu0 %v68
    %v136 = vpop.f32.mrf.mxu0
    %v137 = vadd.f32 %v64, %v136
    %v138 = vpop.f32.mrf.mxu0
    %139 = vdwg.mxu0
    %v140 = vtanh.pop %v137
    %v141 = vld [vmem:[%s3] sm:$0xff]
    %v142 = vld [vmem:[%s3 + $0x8] sm:$0xff]
    %v143 = vld [vmem:[%s3 + $0x10] sm:$0xff]
    %v144 = vld [vmem:[%s3 + $0x18] sm:$0xff]
    %v145 = vld [vmem:[%s3 + $0x20] sm:$0xff]
    %v146 = vld [vmem:[%s3 + $0x28] sm:$0xff]
    %v147 = vld [vmem:[%s3 + $0x30] sm:$0xff]
    %v148 = vld [vmem:[%s3 + $0x38] sm:$0xff]
    %v149 = vld [vmem:[%s3 + $0x40] sm:$0xff]
    %v150 = vld [vmem:[%s3 + $0x48] sm:$0xff]
    %v151 = vld [vmem:[%s3 + $0x50] sm:$0xff]
    %v152 = vld [vmem:[%s3 + $0x58] sm:$0xff]
    %v153 = vld [vmem:[%s3 + $0x60] sm:$0xff]
    %v154 = vld [vmem:[%s3 + $0x68] sm:$0xff]
    %v155 = vld [vmem:[%s3 + $0x70] sm:$0xff]
    %v156 = vld [vmem:[%s3 + $0x78] sm:$0xff]
    %v157 = vld [vmem:[%s4] sm:$0x1]
    %v159 = vlaneseq
    %v160 = vshrl.u32 %v159, 7
    %v161 = vsub.s32 0, %v160
    %v162 = vrot.slane %v157, %v161
    %164 = vmatprep.subr.mxu0 0.0
    %165 = vmatpush1.msra.mxu0 %v156
    %166 = vmatprep.subr.mxu0 0.0
    %167 = vmatpush1.msra.mxu0 %v155
    %168 = vmatprep.subr.mxu0 0.0
    %169 = vmatpush1.msra.mxu0 %v154
    %170 = vmatprep.subr.mxu0 0.0
    %171 = vmatpush1.msra.mxu0 %v153
    %172 = vmatprep.subr.mxu0 0.0
    %173 = vmatpush1.msra.mxu0 %v152
    %174 = vmatprep.subr.mxu0 0.0
    %175 = vmatpush1.msra.mxu0 %v151
    %176 = vmatprep.subr.mxu0 0.0
    %177 = vmatpush1.msra.mxu0 %v150
    %178 = vmatprep.subr.mxu0 0.0
    %179 = vmatpush1.msra.mxu0 %v149
    %180 = vmatprep.subr.mxu0 0.0
    %181 = vmatpush1.msra.mxu0 %v148
    %182 = vmatprep.subr.mxu0 0.0
    %183 = vmatpush1.msra.mxu0 %v147
    %184 = vmatprep.subr.mxu0 0.0
    %185 = vmatpush1.msra.mxu0 %v146
    %186 = vmatprep.subr.mxu0 0.0
    %187 = vmatpush1.msra.mxu0 %v145
    %188 = vmatprep.subr.mxu0 0.0
    %189 = vmatpush1.msra.mxu0 %v144
    %190 = vmatprep.subr.mxu0 0.0
    %191 = vmatpush1.msra.mxu0 %v143
    %192 = vmatprep.subr.mxu0 0.0
    %193 = vmatpush1.msra.mxu0 %v142
    %194 = vmatprep.subr.mxu0 0.0
    %195 = vmatpush1.msra.mxu0 %v141
    %196 = vmatprep.subr.mxu0 0.0
    %197 = vmatpush2.msra.mxu0 0.0
    %198 = vmatprep.subr.mxu0 0.0
    %199 = vmatpush2.msra.mxu0 0.0
    %200 = vmatprep.subr.mxu0 0.0
    %201 = vmatpush2.msra.mxu0 0.0
    %202 = vmatprep.subr.mxu0 0.0
    %203 = vmatpush2.msra.mxu0 0.0
    %204 = vmatprep.subr.mxu0 0.0
    %205 = vmatpush2.msra.mxu0 0.0
    %206 = vmatprep.subr.mxu0 0.0
    %207 = vmatpush2.msra.mxu0 0.0
    %208 = vmatprep.subr.mxu0 0.0
    %209 = vmatpush2.msra.mxu0 0.0
    %210 = vmatprep.subr.mxu0 0.0
    %211 = vmatpush2.msra.mxu0 0.0
    %212 = vmatprep.subr.mxu0 0.0
    %213 = vmatpush2.msra.mxu0 0.0
    %214 = vmatprep.subr.mxu0 0.0
    %215 = vmatpush2.msra.mxu0 0.0
    %216 = vmatprep.subr.mxu0 0.0
    %217 = vmatpush2.msra.mxu0 0.0
    %218 = vmatprep.subr.mxu0 0.0
    %219 = vmatpush2.msra.mxu0 0.0
    %220 = vmatprep.subr.mxu0 0.0
    %221 = vmatpush2.msra.mxu0 0.0
    %222 = vmatprep.subr.mxu0 0.0
    %223 = vmatpush2.msra.mxu0 0.0
    %224 = vmatprep.subr.mxu0 0.0
    %225 = vmatpush2.msra.mxu0 0.0
    %226 = vmatprep.subr.mxu0 0.0
    %227 = vmatpush2.msra.mxu0 0.0
    %228 = vmatprep.mubr.f32.mxu0 0.0
    %229 = vmatmul.mubr.f32.gmra.mxu0 %v140
    %v230 = vpop.f32.mrf.mxu0
    %v231 = vadd.f32 %v162, %v230
    %v232 = vpop.f32.mrf.mxu0
    %233 = vdwg.mxu0
    %v234 = vtanh.pop %v231
    %v235 = vld [vmem:[%s5] sm:$0xff]
    %v236 = vld [vmem:[%s5 + $0x8] sm:$0xff]
    %v237 = vld [vmem:[%s5 + $0x10] sm:$0xff]
    %v238 = vld [vmem:[%s5 + $0x18] sm:$0xff]
    %v239 = vld [vmem:[%s5 + $0x20] sm:$0xff]
    %v240 = vld [vmem:[%s5 + $0x28] sm:$0xff]
    %v241 = vld [vmem:[%s5 + $0x30] sm:$0xff]
    %v242 = vld [vmem:[%s5 + $0x38] sm:$0xff]
    %v243 = vld [vmem:[%s5 + $0x40] sm:$0xff]
    %v244 = vld [vmem:[%s5 + $0x48] sm:$0xff]
    %v245 = vld [vmem:[%s5 + $0x50] sm:$0xff]
    %v246 = vld [vmem:[%s5 + $0x58] sm:$0xff]
    %v247 = vld [vmem:[%s5 + $0x60] sm:$0xff]
    %v248 = vld [vmem:[%s5 + $0x68] sm:$0xff]
    %v249 = vld [vmem:[%s5 + $0x70] sm:$0xff]
    %v250 = vld [vmem:[%s5 + $0x78] sm:$0xff]
    %v251 = vld [vmem:[#allocation2] sm:$0x1]
    %v253 = vlaneseq
    %v254 = vshrl.u32 %v253, 7
    %v255 = vsub.s32 0, %v254
    %v256 = vrot.slane %v251, %v255
    %258 = vmatprep.subr.mxu0 0.0
    %259 = vmatpush1.msra.mxu0 %v250
    %260 = vmatprep.subr.mxu0 0.0
    %261 = vmatpush1.msra.mxu0 %v249
    %262 = vmatprep.subr.mxu0 0.0
    %263 = vmatpush1.msra.mxu0 %v248
    %264 = vmatprep.subr.mxu0 0.0
    %265 = vmatpush1.msra.mxu0 %v247
    %266 = vmatprep.subr.mxu0 0.0
    %267 = vmatpush1.msra.mxu0 %v246
    %268 = vmatprep.subr.mxu0 0.0
    %269 = vmatpush1.msra.mxu0 %v245
    %270 = vmatprep.subr.mxu0 0.0
    %271 = vmatpush1.msra.mxu0 %v244
    %272 = vmatprep.subr.mxu0 0.0
    %273 = vmatpush1.msra.mxu0 %v243
    %274 = vmatprep.subr.mxu0 0.0
    %275 = vmatpush1.msra.mxu0 %v242
    %276 = vmatprep.subr.mxu0 0.0
    %277 = vmatpush1.msra.mxu0 %v241
    %278 = vmatprep.subr.mxu0 0.0
    %279 = vmatpush1.msra.mxu0 %v240
    %280 = vmatprep.subr.mxu0 0.0
    %281 = vmatpush1.msra.mxu0 %v239
    %282 = vmatprep.subr.mxu0 0.0
    %283 = vmatpush1.msra.mxu0 %v238
    %284 = vmatprep.subr.mxu0 0.0
    %285 = vmatpush1.msra.mxu0 %v237
    %286 = vmatprep.subr.mxu0 0.0
    %287 = vmatpush1.msra.mxu0 %v236
    %288 = vmatprep.subr.mxu0 0.0
    %289 = vmatpush1.msra.mxu0 %v235
    %290 = vmatprep.subr.mxu0 0.0
    %291 = vmatpush2.msra.mxu0 0.0
    %292 = vmatprep.subr.mxu0 0.0
    %293 = vmatpush2.msra.mxu0 0.0
    %294 = vmatprep.subr.mxu0 0.0
    %295 = vmatpush2.msra.mxu0 0.0
    %296 = vmatprep.subr.mxu0 0.0
    %297 = vmatpush2.msra.mxu0 0.0
    %298 = vmatprep.subr.mxu0 0.0
    %299 = vmatpush2.msra.mxu0 0.0
    %300 = vmatprep.subr.mxu0 0.0
    %301 = vmatpush2.msra.mxu0 0.0
    %302 = vmatprep.subr.mxu0 0.0
    %303 = vmatpush2.msra.mxu0 0.0
    %304 = vmatprep.subr.mxu0 0.0
    %305 = vmatpush2.msra.mxu0 0.0
    %306 = vmatprep.subr.mxu0 0.0
    %307 = vmatpush2.msra.mxu0 0.0
    %308 = vmatprep.subr.mxu0 0.0
    %309 = vmatpush2.msra.mxu0 0.0
    %310 = vmatprep.subr.mxu0 0.0
    %311 = vmatpush2.msra.mxu0 0.0
    %312 = vmatprep.subr.mxu0 0.0
    %313 = vmatpush2.msra.mxu0 0.0
    %314 = vmatprep.subr.mxu0 0.0
    %315 = vmatpush2.msra.mxu0 0.0
    %316 = vmatprep.subr.mxu0 0.0
    %317 = vmatpush2.msra.mxu0 0.0
    %318 = vmatprep.subr.mxu0 0.0
    %319 = vmatpush2.msra.mxu0 0.0
    %320 = vmatprep.subr.mxu0 0.0
    %321 = vmatpush2.msra.mxu0 0.0
    %322 = vmatprep.mubr.f32.mxu0 0.0
    %323 = vmatmul.mubr.f32.gmra.mxu0 %v234
    %v324 = vpop.f32.mrf.mxu0
    %v325 = vadd.f32 %v256, %v324
    %v326 = vpop.f32.mrf.mxu0
    %327 = vdwg.mxu0
    %vm328 = vcmask 7168
    %329 = vst.msk [vmem:[%s7] sm:$0xff] %vm328, %v325
    // Predicated region
    $region38: #{tpu_custom_call.1} parent=1 // pred_check
      _
    $region39: #{tpu_custom_call.1} parent=1 // pred_check_branch
      %331 = sbr.rel (0) target = $region41
    $region40: #{tpu_custom_call.1} parent=1 // pred_region
      _
    $region41: #{tpu_custom_call.1} parent=1 // pred_fallthru
      _
    // Predicated region
    $region42: #{tpu_custom_call.1} parent=1 // pred_check
      _
    $region43: #{tpu_custom_call.1} parent=1 // pred_check_branch
      %333 = sbr.rel (0) target = $region45
    $region44: #{tpu_custom_call.1} parent=1 // pred_region
      _
    $region45: #{tpu_custom_call.1} parent=1 // pred_fallthru
      _
    %334 = vsyncpa [#allocation4], 1
    %335 = vsyncpa [#allocation6], 1

// kernel: tpu_custom_call.1
$region0: #{tpu_custom_call.1}
  #allocation0 [shape = 'u32[]', space=smem, size = 0x4, offset = 0x4, fixed_abs, tag = 'smem constant byte address 0x4 - core index']
  #allocation1 [shape = 'u32[144,128]{1,0:T(1,128)}', space=vmem, size = 0x12000, scoped, tag = 'internal scratch']
  #allocation2 [shape = 'f32[1,1]{1,0:T(1,128)S(1)}', space=vmem, size = 0x200, scoped, tag = 'scoped memory for tpu_custom_call.1']
  %s0 = inlined_call_operand.vmem [shape: f32[8,32], index: 0, kind: input, shape index: {}]
  %s1 = inlined_call_operand.hbm [shape: f32[32,128], index: 1, kind: input, shape index: {}]
  %s2 = inlined_call_operand.hbm [shape: f32[1,128], index: 2, kind: input, shape index: {}]
  %s3 = inlined_call_operand.vmem [shape: f32[128,128], index: 3, kind: input, shape index: {}]
  %s4 = inlined_call_operand.vmem [shape: f32[1,128], index: 4, kind: input, shape index: {}]
  %s5 = inlined_call_operand.vmem [shape: f32[128,1], index: 5, kind: input, shape index: {}]
  %s6 = inlined_call_operand.<no memory space> [shape: f32[1,1], index: 6, kind: input, shape index: {}]
  %s7 = inlined_call_operand.vmem [shape: f32[8,1], index: 7, kind: output, shape index: {}]
  %s8 = sld [smem:[#allocation0]]
  $region46: #{tpu_custom_call.1} parent=0
    _
  %s10 = ssub.s32 1, %s8
  %s11 = scalar_select 0, %s10, %s8
  %v12 = vstv %s6
  %13 = vst [vmem:[#allocation2] sm:$0x1] %v12
  $region1: #{tpu_custom_call.1} parent=0
    #allocation3 [shape = 'u8[16384]{0}', space=vmem, size = 0x4000, scoped, tag = 'input window, operand 1, single buffered']
    #allocation4 [shape = 's32[1]{0}', space=sflag, size = 0x4, scoped, tag = 'scoped memory for tpu_custom_call.1']
    #allocation5 [shape = 'u8[512]{0}', space=vmem, size = 0x400, scoped, tag = 'input window, operand 2, single buffered']
    #allocation6 [shape = 's32[1]{0}', space=sflag, size = 0x4, scoped, tag = 'scoped memory for tpu_custom_call.1']
    %14 = vsyncpa [#allocation4], 0
    %15 = vsyncpa [#allocation6], 0
    // Predicated region
    $region2: #{tpu_custom_call.1} parent=1 // pred_check
      _
    $region3: #{tpu_custom_call.1} parent=1 // pred_check_branch
      %17 = sbr.rel (0) target = $region5
    $region4: #{tpu_custom_call.1} parent=1 // pred_region
      _
    $region5: #{tpu_custom_call.1} parent=1 // pred_fallthru
      _
    // Predicated region
    $region6: #{tpu_custom_call.1} parent=1 // pred_check
      _
    $region7: #{tpu_custom_call.1} parent=1 // pred_check_branch
      %19 = sbr.rel (0) target = $region9
    $region8: #{tpu_custom_call.1} parent=1 // pred_region
      %s21 = ssub.s32 512, 512
      %22 = vsyncadd [#allocation4], %s21
      %s23 = sshll.u32 [#allocation3], 4
      %s24 = int_to_ptr.vmem [resolvable:$true] %s23
      %29 = dma.hbm_to_vmem [thread:$0]  %s1, 512, %s24, [#allocation4], 128, 128, 8
    $region9: #{tpu_custom_call.1} parent=1 // pred_fallthru
      _
    // Predicated region
    $region10: #{tpu_custom_call.1} parent=1 // pred_check
      _
    $region11: #{tpu_custom_call.1} parent=1 // pred_check_branch
      %31 = sbr.rel (0) target = $region13
    $region12: #{tpu_custom_call.1} parent=1 // pred_region
      %s33 = ssub.s32 16, 16
      %34 = vsyncadd [#allocation6], %s33
      %s36 = sshll.u32 [#allocation5], 4
      %s37 = int_to_ptr.vmem [resolvable:$true] %s36
      %39 = dma.hbm_to_vmem [thread:$0]  %s2, 16, %s37, [#allocation6]
    $region13: #{tpu_custom_call.1} parent=1 // pred_fallthru
      _
    // Predicated region
    $region14: #{tpu_custom_call.1} parent=1 // pred_check
      _
    $region15: #{tpu_custom_call.1} parent=1 // pred_check_branch
      %41 = sbr.rel (0) target = $region17
    $region16: #{tpu_custom_call.1} parent=1 // pred_region
      _
    $region17: #{tpu_custom_call.1} parent=1 // pred_fallthru
      _
    // Predicated region
    $region18: #{tpu_custom_call.1} parent=1 // pred_check
      _
    $region19: #{tpu_custom_call.1} parent=1 // pred_check_branch
      %43 = sbr.rel (0) target = $region21
    $region20: #{tpu_custom_call.1} parent=1 // pred_region
      _
    $region21: #{tpu_custom_call.1} parent=1 // pred_fallthru
      _
    // Predicated region
    $region22: #{tpu_custom_call.1} parent=1 // pred_check
      _
    $region23: #{tpu_custom_call.1} parent=1 // pred_check_branch
      %45 = sbr.rel (0) target = $region25
    $region24: #{tpu_custom_call.1} parent=1 // pred_region
      _
    $region25: #{tpu_custom_call.1} parent=1 // pred_fallthru
      _
    // Predicated region
    $region26: #{tpu_custom_call.1} parent=1 // pred_check
      _
    $region27: #{tpu_custom_call.1} parent=1 // pred_check_branch
      %47 = sbr.rel (0) target = $region29
    $region28: #{tpu_custom_call.1} parent=1 // pred_region
      _
    $region29: #{tpu_custom_call.1} parent=1 // pred_fallthru
      _
    // Predicated region
    $region30: #{tpu_custom_call.1} parent=1 // pred_check
      _
    $region31: #{tpu_custom_call.1} parent=1 // pred_check_branch
      %49 = sbr.rel (0) target = $region33
    $region32: #{tpu_custom_call.1} parent=1 // pred_region
      %50 = dma.done [#allocation4], 512
    $region33: #{tpu_custom_call.1} parent=1 // pred_fallthru
      _
    // Predicated region
    $region34: #{tpu_custom_call.1} parent=1 // pred_check
      _
    $region35: #{tpu_custom_call.1} parent=1 // pred_check_branch
      %52 = sbr.rel (0) target = $region37
    $region36: #{tpu_custom_call.1} parent=1 // pred_region
      %53 = dma.done [#allocation6], 16
    $region37: #{tpu_custom_call.1} parent=1 // pred_fallthru
      _
    %v54 = vld [vmem:[%s0] sm:$0xff]
    %v55 = vld [vmem:[#allocation3] sm:$0xff]
    %v56 = vld [vmem:[#allocation3 + $0x8] sm:$0xff]
    %v57 = vld [vmem:[#allocation3 + $0x10] sm:$0xff]
    %v58 = vld [vmem:[#allocation3 + $0x18] sm:$0xff]
    %v59 = vld [vmem:[#allocation5] sm:$0x1]
    %v61 = vlaneseq
    %v62 = vshrl.u32 %v61, 7
    %v63 = vsub.s32 0, %v62
    %v64 = vrot.slane %v59, %v63
    %vm66 = vcmask 261120
    %v68 = vsel %vm66, %v54, 0
    %70 = vmatprep.subr.mxu0 0.0
    %71 = vmatpush1.msra.mxu0 0.0
    %72 = vmatprep.subr.mxu0 0.0
    %73 = vmatpush1.msra.mxu0 0.0
    %74 = vmatprep.subr.mxu0 0.0
    %75 = vmatpush1.msra.mxu0 0.0
    %76 = vmatprep.subr.mxu0 0.0
    %77 = vmatpush1.msra.mxu0 0.0
    %78 = vmatprep.subr.mxu0 0.0
    %79 = vmatpush1.msra.mxu0 0.0
    %80 = vmatprep.subr.mxu0 0.0
    %81 = vmatpush1.msra.mxu0 0.0
    %82 = vmatprep.subr.mxu0 0.0
    %83 = vmatpush1.msra.mxu0 0.0
    %84 = vmatprep.subr.mxu0 0.0
    %85 = vmatpush1.msra.mxu0 0.0
    %86 = vmatprep.subr.mxu0 0.0
    %87 = vmatpush1.msra.mxu0 0.0
    %88 = vmatprep.subr.mxu0 0.0
    %89 = vmatpush1.msra.mxu0 0.0
    %90 = vmatprep.subr.mxu0 0.0
    %91 = vmatpush1.msra.mxu0 0.0
    %92 = vmatprep.subr.mxu0 0.0
    %93 = vmatpush1.msra.mxu0 0.0
    %94 = vmatprep.subr.mxu0 0.0
    %95 = vmatpush1.msra.mxu0 %v58
    %96 = vmatprep.subr.mxu0 0.0
    %97 = vmatpush1.msra.mxu0 %v57
    %98 = vmatprep.subr.mxu0 0.0
    %99 = vmatpush1.msra.mxu0 %v56
    %100 = vmatprep.subr.mxu0 0.0
    %101 = vmatpush1.msra.mxu0 %v55
    %102 = vmatprep.subr.mxu0 0.0
    %103 = vmatpush2.msra.mxu0 0.0
    %104 = vmatprep.subr.mxu0 0.0
    %105 = vmatpush2.msra.mxu0 0.0
    %106 = vmatprep.subr.mxu0 0.0
    %107 = vmatpush2.msra.mxu0 0.0
    %108 = vmatprep.subr.mxu0 0.0
    %109 = vmatpush2.msra.mxu0 0.0
    %110 = vmatprep.subr.mxu0 0.0
    %111 = vmatpush2.msra.mxu0 0.0
    %112 = vmatprep.subr.mxu0 0.0
    %113 = vmatpush2.msra.mxu0 0.0
    %114 = vmatprep.subr.mxu0 0.0
    %115 = vmatpush2.msra.mxu0 0.0
    %116 = vmatprep.subr.mxu0 0.0
    %117 = vmatpush2.msra.mxu0 0.0
    %118 = vmatprep.subr.mxu0 0.0
    %119 = vmatpush2.msra.mxu0 0.0
    %120 = vmatprep.subr.mxu0 0.0
    %121 = vmatpush2.msra.mxu0 0.0
    %122 = vmatprep.subr.mxu0 0.0
    %123 = vmatpush2.msra.mxu0 0.0
    %124 = vmatprep.subr.mxu0 0.0
    %125 = vmatpush2.msra.mxu0 0.0
    %126 = vmatprep.subr.mxu0 0.0
    %127 = vmatpush2.msra.mxu0 0.0
    %128 = vmatprep.subr.mxu0 0.0
    %129 = vmatpush2.msra.mxu0 0.0
    %130 = vmatprep.subr.mxu0 0.0
    %131 = vmatpush2.msra.mxu0 0.0
    %132 = vmatprep.subr.mxu0 0.0
    %133 = vmatpush2.msra.mxu0 0.0
    %134 = vmatprep.mubr.f32.mxu0 0.0
    %135 = vmatmul.mubr.f32.gmra.mxu0 %v68
    %v136 = vpop.f32.mrf.mxu0
    %v137 = vadd.f32 %v64, %v136
    %v138 = vpop.f32.mrf.mxu0
    %139 = vdwg.mxu0
    %v140 = vtanh.pop %v137
    %v141 = vld [vmem:[%s3] sm:$0xff]
    %v142 = vld [vmem:[%s3 + $0x8] sm:$0xff]
    %v143 = vld [vmem:[%s3 + $0x10] sm:$0xff]
    %v144 = vld [vmem:[%s3 + $0x18] sm:$0xff]
    %v145 = vld [vmem:[%s3 + $0x20] sm:$0xff]
    %v146 = vld [vmem:[%s3 + $0x28] sm:$0xff]
    %v147 = vld [vmem:[%s3 + $0x30] sm:$0xff]
    %v148 = vld [vmem:[%s3 + $0x38] sm:$0xff]
    %v149 = vld [vmem:[%s3 + $0x40] sm:$0xff]
    %v150 = vld [vmem:[%s3 + $0x48] sm:$0xff]
    %v151 = vld [vmem:[%s3 + $0x50] sm:$0xff]
    %v152 = vld [vmem:[%s3 + $0x58] sm:$0xff]
    %v153 = vld [vmem:[%s3 + $0x60] sm:$0xff]
    %v154 = vld [vmem:[%s3 + $0x68] sm:$0xff]
    %v155 = vld [vmem:[%s3 + $0x70] sm:$0xff]
    %v156 = vld [vmem:[%s3 + $0x78] sm:$0xff]
    %v157 = vld [vmem:[%s4] sm:$0x1]
    %v159 = vlaneseq
    %v160 = vshrl.u32 %v159, 7
    %v161 = vsub.s32 0, %v160
    %v162 = vrot.slane %v157, %v161
    %164 = vmatprep.subr.mxu0 0.0
    %165 = vmatpush1.msra.mxu0 %v156
    %166 = vmatprep.subr.mxu0 0.0
    %167 = vmatpush1.msra.mxu0 %v155
    %168 = vmatprep.subr.mxu0 0.0
    %169 = vmatpush1.msra.mxu0 %v154
    %170 = vmatprep.subr.mxu0 0.0
    %171 = vmatpush1.msra.mxu0 %v153
    %172 = vmatprep.subr.mxu0 0.0
    %173 = vmatpush1.msra.mxu0 %v152
    %174 = vmatprep.subr.mxu0 0.0
    %175 = vmatpush1.msra.mxu0 %v151
    %176 = vmatprep.subr.mxu0 0.0
    %177 = vmatpush1.msra.mxu0 %v150
    %178 = vmatprep.subr.mxu0 0.0
    %179 = vmatpush1.msra.mxu0 %v149
    %180 = vmatprep.subr.mxu0 0.0
    %181 = vmatpush1.msra.mxu0 %v148
    %182 = vmatprep.subr.mxu0 0.0
    %183 = vmatpush1.msra.mxu0 %v147
    %184 = vmatprep.subr.mxu0 0.0
    %185 = vmatpush1.msra.mxu0 %v146
    %186 = vmatprep.subr.mxu0 0.0
    %187 = vmatpush1.msra.mxu0 %v145
    %188 = vmatprep.subr.mxu0 0.0
    %189 = vmatpush1.msra.mxu0 %v144
    %190 = vmatprep.subr.mxu0 0.0
    %191 = vmatpush1.msra.mxu0 %v143
    %192 = vmatprep.subr.mxu0 0.0
    %193 = vmatpush1.msra.mxu0 %v142
    %194 = vmatprep.subr.mxu0 0.0
    %195 = vmatpush1.msra.mxu0 %v141
    %196 = vmatprep.subr.mxu0 0.0
    %197 = vmatpush2.msra.mxu0 0.0
    %198 = vmatprep.subr.mxu0 0.0
    %199 = vmatpush2.msra.mxu0 0.0
    %200 = vmatprep.subr.mxu0 0.0
    %201 = vmatpush2.msra.mxu0 0.0
    %202 = vmatprep.subr.mxu0 0.0
    %203 = vmatpush2.msra.mxu0 0.0
    %204 = vmatprep.subr.mxu0 0.0
    %205 = vmatpush2.msra.mxu0 0.0
    %206 = vmatprep.subr.mxu0 0.0
    %207 = vmatpush2.msra.mxu0 0.0
    %208 = vmatprep.subr.mxu0 0.0
    %209 = vmatpush2.msra.mxu0 0.0
    %210 = vmatprep.subr.mxu0 0.0
    %211 = vmatpush2.msra.mxu0 0.0
    %212 = vmatprep.subr.mxu0 0.0
    %213 = vmatpush2.msra.mxu0 0.0
    %214 = vmatprep.subr.mxu0 0.0
    %215 = vmatpush2.msra.mxu0 0.0
    %216 = vmatprep.subr.mxu0 0.0
    %217 = vmatpush2.msra.mxu0 0.0
    %218 = vmatprep.subr.mxu0 0.0
    %219 = vmatpush2.msra.mxu0 0.0
    %220 = vmatprep.subr.mxu0 0.0
    %221 = vmatpush2.msra.mxu0 0.0
    %222 = vmatprep.subr.mxu0 0.0
    %223 = vmatpush2.msra.mxu0 0.0
    %224 = vmatprep.subr.mxu0 0.0
    %225 = vmatpush2.msra.mxu0 0.0
    %226 = vmatprep.subr.mxu0 0.0
    %227 = vmatpush2.msra.mxu0 0.0
    %228 = vmatprep.mubr.f32.mxu0 0.0
    %229 = vmatmul.mubr.f32.gmra.mxu0 %v140
    %v230 = vpop.f32.mrf.mxu0
    %v231 = vadd.f32 %v162, %v230
    %v232 = vpop.f32.mrf.mxu0
    %233 = vdwg.mxu0
    %v234 = vtanh.pop %v231
    %v235 = vld [vmem:[%s5] sm:$0xff]
    %v236 = vld [vmem:[%s5 + $0x8] sm:$0xff]
    %v237 = vld [vmem:[%s5 + $0x10] sm:$0xff]
    %v238 = vld [vmem:[%s5 + $0x18] sm:$0xff]
    %v239 = vld [vmem:[%s5 + $0x20] sm:$0xff]
    %v240 = vld [vmem:[%s5 + $0x28] sm:$0xff]
    %v241 = vld [vmem:[%s5 + $0x30] sm:$0xff]
    %v242 = vld [vmem:[%s5 + $0x38] sm:$0xff]
    %v243 = vld [vmem:[%s5 + $0x40] sm:$0xff]
    %v244 = vld [vmem:[%s5 + $0x48] sm:$0xff]
    %v245 = vld [vmem:[%s5 + $0x50] sm:$0xff]
    %v246 = vld [vmem:[%s5 + $0x58] sm:$0xff]
    %v247 = vld [vmem:[%s5 + $0x60] sm:$0xff]
    %v248 = vld [vmem:[%s5 + $0x68] sm:$0xff]
    %v249 = vld [vmem:[%s5 + $0x70] sm:$0xff]
    %v250 = vld [vmem:[%s5 + $0x78] sm:$0xff]
    %v251 = vld [vmem:[#allocation2] sm:$0x1]
    %v253 = vlaneseq
    %v254 = vshrl.u32 %v253, 7
    %v255 = vsub.s32 0, %v254
    %v256 = vrot.slane %v251, %v255
    %258 = vmatprep.subr.mxu0 0.0
    %259 = vmatpush1.msra.mxu0 %v250
    %260 = vmatprep.subr.mxu0 0.0
    %261 = vmatpush1.msra.mxu0 %v249
    %262 = vmatprep.subr.mxu0 0.0
    %263 = vmatpush1.msra.mxu0 %v248
    %264 = vmatprep.subr.mxu0 0.0
    %265 = vmatpush1.msra.mxu0 %v247
    %266 = vmatprep.subr.mxu0 0.0
    %267 = vmatpush1.msra.mxu0 %v246
    %268 = vmatprep.subr.mxu0 0.0
    %269 = vmatpush1.msra.mxu0 %v245
    %270 = vmatprep.subr.mxu0 0.0
    %271 = vmatpush1.msra.mxu0 %v244
    %272 = vmatprep.subr.mxu0 0.0
    %273 = vmatpush1.msra.mxu0 %v243
    %274 = vmatprep.subr.mxu0 0.0
    %275 = vmatpush1.msra.mxu0 %v242
    %276 = vmatprep.subr.mxu0 0.0
    %277 = vmatpush1.msra.mxu0 %v241
    %278 = vmatprep.subr.mxu0 0.0
    %279 = vmatpush1.msra.mxu0 %v240
    %280 = vmatprep.subr.mxu0 0.0
    %281 = vmatpush1.msra.mxu0 %v239
    %282 = vmatprep.subr.mxu0 0.0
    %283 = vmatpush1.msra.mxu0 %v238
    %284 = vmatprep.subr.mxu0 0.0
    %285 = vmatpush1.msra.mxu0 %v237
    %286 = vmatprep.subr.mxu0 0.0
    %287 = vmatpush1.msra.mxu0 %v236
    %288 = vmatprep.subr.mxu0 0.0
    %289 = vmatpush1.msra.mxu0 %v235
    %290 = vmatprep.subr.mxu0 0.0
    %291 = vmatpush2.msra.mxu0 0.0
    %292 = vmatprep.subr.mxu0 0.0
    %293 = vmatpush2.msra.mxu0 0.0
    %294 = vmatprep.subr.mxu0 0.0
    %295 = vmatpush2.msra.mxu0 0.0
    %296 = vmatprep.subr.mxu0 0.0
    %297 = vmatpush2.msra.mxu0 0.0
    %298 = vmatprep.subr.mxu0 0.0
    %299 = vmatpush2.msra.mxu0 0.0
    %300 = vmatprep.subr.mxu0 0.0
    %301 = vmatpush2.msra.mxu0 0.0
    %302 = vmatprep.subr.mxu0 0.0
    %303 = vmatpush2.msra.mxu0 0.0
    %304 = vmatprep.subr.mxu0 0.0
    %305 = vmatpush2.msra.mxu0 0.0
    %306 = vmatprep.subr.mxu0 0.0
    %307 = vmatpush2.msra.mxu0 0.0
    %308 = vmatprep.subr.mxu0 0.0
    %309 = vmatpush2.msra.mxu0 0.0
    %310 = vmatprep.subr.mxu0 0.0
    %311 = vmatpush2.msra.mxu0 0.0
    %312 = vmatprep.subr.mxu0 0.0
    %313 = vmatpush2.msra.mxu0 0.0
    %314 = vmatprep.subr.mxu0 0.0
    %315 = vmatpush2.msra.mxu0 0.0
    %316 = vmatprep.subr.mxu0 0.0
    %317 = vmatpush2.msra.mxu0 0.0
    %318 = vmatprep.subr.mxu0 0.0
    %319 = vmatpush2.msra.mxu0 0.0
    %320 = vmatprep.subr.mxu0 0.0
    %321 = vmatpush2.msra.mxu0 0.0
    %322 = vmatprep.mubr.f32.mxu0 0.0
    %323 = vmatmul.mubr.f32.gmra.mxu0 %v234
    %v324 = vpop.f32.mrf.mxu0
    %v325 = vadd.f32 %v256, %v324
    %v326 = vpop.f32.mrf.mxu0
    %327 = vdwg.mxu0
    %vm328 = vcmask 7168
    %329 = vst.msk [vmem:[%s7] sm:$0xff] %vm328, %v325
    // Predicated region
    $region38: #{tpu_custom_call.1} parent=1 // pred_check
      _
    $region39: #{tpu_custom_call.1} parent=1 // pred_check_branch
      %331 = sbr.rel (0) target = $region41
    $region40: #{tpu_custom_call.1} parent=1 // pred_region
      _
    $region41: #{tpu_custom_call.1} parent=1 // pred_fallthru
      _
    // Predicated region
    $region42: #{tpu_custom_call.1} parent=1 // pred_check
      _
    $region43: #{tpu_custom_call.1} parent=1 // pred_check_branch
      %333 = sbr.rel (0) target = $region45
    $region44: #{tpu_custom_call.1} parent=1 // pred_region
      _
    $region45: #{tpu_custom_call.1} parent=1 // pred_fallthru
      _
    %334 = vsyncpa [#allocation4], 1
    %335 = vsyncpa [#allocation6], 1

</llo_original>
